<compile_context>
chip_gen: v7x
topology: tpu7x:2x2x1
jax: 0.10.0
libtpu: 0.0.40
codegen_flags: <defaults>
</compile_context>

<pallas_src>
import functools

import jax
import jax.numpy as jnp
from jax.experimental import pallas as pl
from jax.experimental.pallas import tpu as pltpu

_EPS = 1e-6  # F.pairwise_distance default eps (added element-wise to the difference)


def _contrastive_loss_kernel(o1_ref, o2_ref, label_ref, out_ref, *, margin, true_b, tb):
    i = pl.program_id(0)

    # Cast to f32 *inside* the kernel (inputs stream from HBM in their native dtype).
    o1 = o1_ref[...].astype(jnp.float32)                         # (tb, D)
    o2 = o2_ref[...].astype(jnp.float32)
    diff = o1 - o2 + _EPS
    sq_dist = jnp.sum(diff * diff, axis=-1, keepdims=True)       # (tb, 1) == d^2 (exact)
    dist = jnp.sqrt(sq_dist)                                     # (tb, 1) euclidean distance

    label = label_ref[...].astype(jnp.float32)                   # (tb, 1)
    hinge = jnp.maximum(margin - dist, 0.0)
    per_pair = (1.0 - label) * sq_dist + label * hinge * hinge   # (tb, 1)

    def _write(vals):
        out_ref[...] = jnp.broadcast_to(jnp.sum(vals), (1, 8, 128))

    if true_b % tb != 0:
        # Only the LAST block can contain rows past the true batch; gate the mask there.
        is_last = i == pl.num_programs(0) - 1

        @pl.when(jnp.logical_not(is_last))
        def _():
            _write(per_pair)

        @pl.when(is_last)
        def _():
            row = i * tb + jax.lax.broadcasted_iota(jnp.int32, (tb, 1), 0)
            # NOTE: must stay a select (jnp.where), not a multiply-by-mask — out-of-bounds
            # rows of the ragged final block hold undefined data (possibly NaN/Inf).
            _write(jnp.where(row < true_b, per_pair, 0.0))
    else:
        _write(per_pair)


def _sublane_multiple(dtype):
    itemsize = jnp.dtype(dtype).itemsize
    return 8 * max(1, 4 // itemsize)          # f32 -> 8, bf16 -> 16, int8/fp8 -> 32


def _vmem_limit_bytes():
    """Scoped-VMEM limit derived from the chip: ~half of physical, capped at 64 MiB."""
    cap = None
    try:
        cap = int(pltpu.get_tpu_info().vmem_capacity_bytes)
    except Exception:
        cap = None
    if cap is None:
        cap = 64 * 1024 * 1024                # conservative (v7x per-TC) if query unavailable
    return max(32 * 1024 * 1024, min(64 * 1024 * 1024, cap // 2))


def _pick_block_rows(B, D, itemsize, vmem_limit_bytes, mult):
    """Pick batch-tile rows from a VMEM byte budget (lane-padded), multiple of `mult`."""
    lane_d = ((max(D, 1) + 127) // 128) * 128          # VMEM lane-padded row width
    # Per-row VMEM cost: 2 inputs x 2 pipeline buffers (native dtype) + ~3 f32 temporaries
    # + a handful of lane-padded (tb, 1) slabs (dist / label / per_pair).
    per_row_vmem = 4 * lane_d * itemsize + 3 * lane_d * 4 + 6 * 128 * 4
    budget = (vmem_limit_bytes * 3) // 4               # leave pipeline/scratch headroom
    rows = budget // per_row_vmem
    # Beyond ~8 MiB of HBM payload per input block there are diminishing returns.
    rows = min(rows, (8 * 1024 * 1024) // max(D * itemsize, 1))
    rows = max(mult, (rows // mult) * mult)
    b_up = ((B + mult - 1) // mult) * mult
    return min(rows, b_up)


def contrastive_loss(output1, output2, label, margin=2.0, block_rows=None):
    """output1, output2: (B, D) in any float dtype; label: (B,) or (B, 1). Returns scalar f32."""
    B, D = output1.shape
    assert output2.shape == (B, D)

    # Labels are tiny (B elements); embeddings stay in their native dtype (no HBM upcast).
    lbl = jnp.reshape(label, (B, 1)).astype(jnp.float32)

    itemsize = jnp.dtype(output1.dtype).itemsize
    mult = _sublane_multiple(output1.dtype)
    vmem_limit = _vmem_limit_bytes()
    if block_rows is None:
        tb = _pick_block_rows(B, D, itemsize, vmem_limit, mult)
    else:
        tb = max(mult, (int(block_rows) // mult) * mult)
    grid_n = pl.cdiv(B, tb)                   # ragged final block allowed; masked in-kernel

    kernel = functools.partial(
        _contrastive_loss_kernel, margin=float(margin), true_b=B, tb=tb)

    cost = pl.CostEstimate(
        flops=5 * B * D + 8 * B,
        transcendentals=B,                    # one sqrt per pair
        bytes_accessed=2 * B * D * itemsize + B * 4 + grid_n * 8 * 128 * 4,
    )

    partials = pl.pallas_call(
        kernel,
        out_shape=jax.ShapeDtypeStruct((grid_n, 8, 128), jnp.float32),
        grid_spec=pltpu.PrefetchScalarGridSpec(
            num_scalar_prefetch=0,
            grid=(grid_n,),
            in_specs=[
                pl.BlockSpec((tb, D), lambda i: (i, 0)),
                pl.BlockSpec((tb, D), lambda i: (i, 0)),
                pl.BlockSpec((tb, 1), lambda i: (i, 0)),
            ],
            out_specs=pl.BlockSpec((1, 8, 128), lambda i: (i, 0, 0)),
        ),
        compiler_params=pltpu.CompilerParams(
            dimension_semantics=("parallel",),        # independent per-block partial sums
            vmem_limit_bytes=vmem_limit,
        ),
        cost_estimate=cost,
    )(output1, output2, lbl)

    # Tiny final reduction over the per-block partial sums; mean over the TRUE batch.
    return jnp.sum(partials[:, 0, 0]) * (1.0 / B)


def contrastive_loss_ref(output1, output2, label, margin=2.0):
    """Pure-JAX reference mirroring the PyTorch forward (computed in f32)."""
    o1 = output1.astype(jnp.float32)
    o2 = output2.astype(jnp.float32)
    lbl = jnp.reshape(label, (o1.shape[0], 1)).astype(jnp.float32)
    d = jnp.sqrt(jnp.sum((o1 - o2 + _EPS) ** 2, axis=-1, keepdims=True))
    loss = (1.0 - lbl) * d**2 + lbl * jnp.maximum(margin - d, 0.0) ** 2
    return jnp.mean(loss)


if __name__ == "__main__":
    key = jax.random.PRNGKey(0)
    k1, k2, k3 = jax.random.split(key, 3)

    # Small demo shape from the Siamese-network module: (B, D) embeddings + (B, 1) labels.
    B, D = 8, 32
    output1 = jax.random.normal(k1, (B, D), dtype=jnp.float32)
    output2 = jax.random.normal(k2, (B, D), dtype=jnp.float32)
    label = jax.random.bernoulli(k3, 0.5, (B, 1)).astype(jnp.float32)

    loss = jax.block_until_ready(contrastive_loss(output1, output2, label, margin=2.0))
    ref = contrastive_loss_ref(output1, output2, label, margin=2.0)
    assert jnp.allclose(loss, ref, rtol=1e-5, atol=1e-5), (loss, ref)

    # Multi-block tiled path with a ragged final block (no wrapper-side padding; in-kernel mask).
    k4, k5, k6 = jax.random.split(jax.random.PRNGKey(1), 3)
    B2, D2 = 20, 32
    o1b = jax.random.normal(k4, (B2, D2), dtype=jnp.float32)
    o2b = jax.random.normal(k5, (B2, D2), dtype=jnp.float32)
    lblb = jax.random.bernoulli(k6, 0.5, (B2, 1)).astype(jnp.float32)
    loss2 = jax.block_until_ready(
        contrastive_loss(o1b, o2b, lblb, margin=2.0, block_rows=8))
    ref2 = contrastive_loss_ref(o1b, o2b, lblb, margin=2.0)
    assert jnp.allclose(loss2, ref2, rtol=1e-5, atol=1e-5), (loss2, ref2)

    # bf16 inputs: embeddings stream in bf16 and are cast to f32 inside the kernel.
    k7, k8, k9 = jax.random.split(jax.random.PRNGKey(2), 3)
    B3, D3 = 16, 32
    o1c = jax.random.normal(k7, (B3, D3), dtype=jnp.bfloat16)
    o2c = jax.random.normal(k8, (B3, D3), dtype=jnp.bfloat16)
    lblc = jax.random.bernoulli(k9, 0.5, (B3, 1)).astype(jnp.float32)
    loss3 = jax.block_until_ready(contrastive_loss(o1c, o2c, lblc, margin=2.0))
    ref3 = contrastive_loss_ref(o1c, o2c, lblc, margin=2.0)
    assert jnp.allclose(loss3, ref3, rtol=1e-4, atol=1e-5), (loss3, ref3)

    print("KERNEL_OK")
</pallas_src>

<mosaic_0001>
module attributes {stable_mosaic.version = 11 : i64} {
  func.func @_contrastive_loss_kernel(%arg0: i32, %arg1: memref<8x32xf32, #tpu.memory_space<vmem>>, %arg2: memref<8x32xf32, #tpu.memory_space<vmem>>, %arg3: memref<8x1xf32, #tpu.memory_space<vmem>>, %arg4: memref<1x8x128xf32, #tpu.memory_space<vmem>>) attributes {dimension_semantics = [#tpu.dimension_semantics<parallel>], iteration_bounds = array<i64: 1>, scalar_prefetch = 0 : i64, scratch_operands = 0 : i64, tpu.core_type = #tpu.core_type<tc>, window_params = [{transform_indices = @transform_0, window_bounds = array<i64: 8, 32>}, {transform_indices = @transform_1, window_bounds = array<i64: 8, 32>}, {transform_indices = @transform_2, window_bounds = array<i64: 8, 1>}, {transform_indices = @transform_3, window_bounds = array<i64: 1, 8, 128>}]} {
    %c0 = arith.constant 0 : index
    %c0_0 = arith.constant 0 : index
    %0 = vector.load %arg1[%c0, %c0_0] : memref<8x32xf32, #tpu.memory_space<vmem>>, vector<8x32xf32>
    %c0_1 = arith.constant 0 : index
    %c0_2 = arith.constant 0 : index
    %1 = vector.load %arg2[%c0_1, %c0_2] : memref<8x32xf32, #tpu.memory_space<vmem>>, vector<8x32xf32>
    %2 = arith.subf %0, %1 : vector<8x32xf32>
    %cst = arith.constant 9.99999997E-7 : f32
    %3 = vector.broadcast %cst : f32 to vector<8x32xf32>
    %4 = arith.addf %2, %3 : vector<8x32xf32>
    %5 = arith.mulf %4, %4 : vector<8x32xf32>
    %cst_3 = arith.constant dense<0.000000e+00> : vector<8xf32>
    %6 = vector.multi_reduction <add>, %5, %cst_3 [1] : vector<8x32xf32> to vector<8xf32>
    %7 = vector.shape_cast %6 : vector<8xf32> to vector<8x1xf32>
    %8 = math.sqrt %7 : vector<8x1xf32>
    %c0_4 = arith.constant 0 : index
    %c0_5 = arith.constant 0 : index
    %9 = vector.load %arg3[%c0_4, %c0_5] : memref<8x1xf32, #tpu.memory_space<vmem>>, vector<8x1xf32>
    %cst_6 = arith.constant 2.000000e+00 : f32
    %10 = vector.broadcast %cst_6 : f32 to vector<8x1xf32>
    %11 = arith.subf %10, %8 : vector<8x1xf32>
    %cst_7 = arith.constant 0.000000e+00 : f32
    %12 = vector.broadcast %cst_7 : f32 to vector<8x1xf32>
    %13 = arith.maximumf %11, %12 : vector<8x1xf32>
    %cst_8 = arith.constant 1.000000e+00 : f32
    %14 = vector.broadcast %cst_8 : f32 to vector<8x1xf32>
    %15 = arith.subf %14, %9 : vector<8x1xf32>
    %16 = arith.mulf %15, %7 : vector<8x1xf32>
    %17 = arith.mulf %9, %13 : vector<8x1xf32>
    %18 = arith.mulf %17, %13 : vector<8x1xf32>
    %19 = arith.addf %16, %18 : vector<8x1xf32>
    %20 = vector.shape_cast %19 : vector<8x1xf32> to vector<1x8x1xf32>
    %cst_9 = arith.constant dense<0.000000e+00> : vector<1xf32>
    %21 = vector.multi_reduction <add>, %20, %cst_9 [1, 2] : vector<1x8x1xf32> to vector<1xf32>
    %22 = vector.shape_cast %21 : vector<1xf32> to vector<1x1x1xf32>
    %23 = vector.extract %22[0, 0, 0] : f32 from vector<1x1x1xf32>
    %24 = vector.broadcast %23 : f32 to vector<1x8x128xf32>
    %c0_10 = arith.constant 0 : index
    %c0_11 = arith.constant 0 : index
    %c0_12 = arith.constant 0 : index
    %25 = vector.load %arg4[%c0_10, %c0_11, %c0_12] : memref<1x8x128xf32, #tpu.memory_space<vmem>>, vector<1x8x128xf32>
    tpu.vector_store %arg4[%c0_10, %c0_11, %c0_12], %24 {strides = array<i32>} : memref<1x8x128xf32, #tpu.memory_space<vmem>>, vector<1x8x128xf32>,
    return
  }
  func.func @transform_0(%arg0: i32) -> (i32, i32) {
    %c0_i32 = arith.constant 0 : i32
    %c0_i32_0 = arith.constant 0 : i32
    return %arg0, %c0_i32 : i32, i32
  }
  func.func @transform_1(%arg0: i32) -> (i32, i32) {
    %c0_i32 = arith.constant 0 : i32
    %c0_i32_0 = arith.constant 0 : i32
    return %arg0, %c0_i32 : i32, i32
  }
  func.func @transform_2(%arg0: i32) -> (i32, i32) {
    %c0_i32 = arith.constant 0 : i32
    %c0_i32_0 = arith.constant 0 : i32
    return %arg0, %c0_i32 : i32, i32
  }
  func.func @transform_3(%arg0: i32) -> (i32, i32, i32) {
    %c0_i32 = arith.constant 0 : i32
    %c0_i32_0 = arith.constant 0 : i32
    %c0_i32_1 = arith.constant 0 : i32
    return %arg0, %c0_i32, %c0_i32_0 : i32, i32, i32
  }
}

</mosaic_0001>

<llo_original>
// kernel: tpu_custom_call.1
$region0: #{tpu_custom_call.1}
  #allocation0 [shape = 'u32[]', space=smem, size = 0x4, offset = 0x4, fixed_abs, tag = 'smem constant byte address 0x4 - core index']
  #allocation1 [shape = 'u32[144,128]{1,0:T(1,128)}', space=vmem, size = 0x12000, scoped, tag = 'internal scratch']
  %s0 = inlined_call_operand.vmem [shape: f32[8,32], index: 0, kind: input, shape index: {}]
  %s1 = inlined_call_operand.hbm [shape: f32[8,32], index: 1, kind: input, shape index: {}]
  %s2 = inlined_call_operand.vmem [shape: f32[8,1], index: 2, kind: input, shape index: {}]
  %s3 = inlined_call_operand.hbm [shape: f32[1,8,128], index: 3, kind: output, shape index: {}]
  %s4 = sld [smem:[#allocation0]]
  $region26: #{tpu_custom_call.1} parent=0
    _
  %s6 = ssub.s32 1, %s4
  %s7 = scalar_select 0, %s6, %s4
  $region1: #{tpu_custom_call.1} parent=0
    #allocation2 [shape = 'u8[4096]{0}', space=vmem, size = 0x1000, scoped, tag = 'input window, operand 1, single buffered']
    #allocation3 [shape = 's32[1]{0}', space=sflag, size = 0x4, scoped, tag = 'scoped memory for tpu_custom_call.1']
    #allocation4 [shape = 's32[1]{0}', space=sflag, size = 0x4, scoped, tag = 'scoped memory for tpu_custom_call.1']
    #allocation5 [shape = 'u8[4096]{0}', space=vmem, size = 0x1000, scoped, tag = 'output window, operand 0, single buffered']
    %8 = vsyncpa [#allocation3], 0
    %9 = vsyncpa [#allocation4], 0
    // Predicated region
    $region2: #{tpu_custom_call.1} parent=1 // pred_check
      _
    $region3: #{tpu_custom_call.1} parent=1 // pred_check_branch
      %11 = sbr.rel (0) target = $region5
    $region4: #{tpu_custom_call.1} parent=1 // pred_region
      _
    $region5: #{tpu_custom_call.1} parent=1 // pred_fallthru
      _
    // Predicated region
    $region6: #{tpu_custom_call.1} parent=1 // pred_check
      _
    $region7: #{tpu_custom_call.1} parent=1 // pred_check_branch
      %13 = sbr.rel (0) target = $region9
    $region8: #{tpu_custom_call.1} parent=1 // pred_region
      %s15 = ssub.s32 128, 128
      %16 = vsyncadd [#allocation3], %s15
      %s18 = sshll.u32 [#allocation2], 4
      %s19 = int_to_ptr.vmem [resolvable:$true] %s18
      %21 = dma.hbm_to_vmem [thread:$0]  %s1, 128, %s19, [#allocation3]
    $region9: #{tpu_custom_call.1} parent=1 // pred_fallthru
      _
    // Predicated region
    $region10: #{tpu_custom_call.1} parent=1 // pred_check
      _
    $region11: #{tpu_custom_call.1} parent=1 // pred_check_branch
      %23 = sbr.rel (0) target = $region13
    $region12: #{tpu_custom_call.1} parent=1 // pred_region
      _
    $region13: #{tpu_custom_call.1} parent=1 // pred_fallthru
      _
    // Predicated region
    $region14: #{tpu_custom_call.1} parent=1 // pred_check
      _
    $region15: #{tpu_custom_call.1} parent=1 // pred_check_branch
      %25 = sbr.rel (0) target = $region17
    $region16: #{tpu_custom_call.1} parent=1 // pred_region
      %26 = dma.done [#allocation3], 128
    $region17: #{tpu_custom_call.1} parent=1 // pred_fallthru
      _
    %v27 = vld [vmem:[%s0] sm:$0xff]
    %v28 = vld [vmem:[#allocation2] sm:$0xff]
    %v29 = vsub.f32 %v27, %v28
    %v30 = vadd.f32 %v29, 1e-06
    %v31 = vmul.f32 %v30, %v30
    %vm32 = vcmask 261120
    %v33 = vsel %vm32, %v31, 0.0
    %34 = vadd.xlane.f32.xlu0 %v33
    %v35 = vpop.xlane.xlu0 %34
    %v36 = vrsqrt.pop %v35
    %v37 = vmul.f32 %v35, %v36
    %vm38 = vcmp.eq.f32.partialorder %v35, inf
    %v39 = vsel %vm38, %v35, %v37
    %vm40 = vcmp.eq.f32.partialorder %v35, 0.0
    %v41 = vand.u32 %v35, 2147483648
    %v42 = vsel %vm40, %v41, %v39
    %v43 = vld [vmem:[%s2] sm:$0xff]
    %v44 = vsub.f32 2.0, %v42
    %v45 = vmax.f32 %v44, 0.0
    %v46 = vsub.f32 1.0, %v43
    %v47 = vmul.f32 %v46, %v35
    %v48 = vmul.f32 %v43, %v45
    %v49 = vmul.f32 %v48, %v45
    %v50 = vadd.f32 %v47, %v49
    %vm51 = vcmask 7168
    %v52 = vsel %vm51, %v50, 0.0
    %53 = vadd.xlane.f32.xlu0 %v52
    %v54 = vpop.xlane.xlu0 %53
    %v55 = vrot.slane %v54, 4
    %v56 = vadd.f32 %v54, %v55
    %v57 = vrot.slane %v56, 2
    %v58 = vadd.f32 %v56, %v57
    %v59 = vrot.slane %v58, 1
    %v60 = vadd.f32 %v58, %v59
    %s61 = vtos %v60
    %v62 = vstv %s61
    %63 = vst [vmem:[#allocation5] sm:$0xff] %v62
    // Predicated region
    $region18: #{tpu_custom_call.1} parent=1 // pred_check
      _
    $region19: #{tpu_custom_call.1} parent=1 // pred_check_branch
      %65 = sbr.rel (0) target = $region21
    $region20: #{tpu_custom_call.1} parent=1 // pred_region
      %s67 = ssub.s32 128, 128
      %68 = vsyncadd [#allocation4], %s67
      %s70 = sshll.u32 [#allocation5], 4
      %s71 = int_to_ptr.vmem [resolvable:$true] %s70
      %73 = dma.vmem_to_hbm [thread:$0]  %s71, 128, %s3, [#allocation4]
    $region21: #{tpu_custom_call.1} parent=1 // pred_fallthru
      _
    // Predicated region
    $region22: #{tpu_custom_call.1} parent=1 // pred_check
      _
    $region23: #{tpu_custom_call.1} parent=1 // pred_check_branch
      %75 = sbr.rel (0) target = $region25
    $region24: #{tpu_custom_call.1} parent=1 // pred_region
      %76 = dma.done [#allocation4], 128
    $region25: #{tpu_custom_call.1} parent=1 // pred_fallthru
      _
    %77 = vsyncpa [#allocation3], 1
    %78 = vsyncpa [#allocation4], 1

</llo_original>
